<compile_context>
chip_gen: v7x
topology: tpu7x:2x2x1
jax: 0.10.0
libtpu: 0.0.40
codegen_flags: <defaults>
</compile_context>

<pallas_src>
import functools
import math

import jax
import jax.numpy as jnp
from jax.experimental import pallas as pl
from jax.experimental.pallas import tpu as pltpu

_BN_EPS = 1e-5


def _round_up(x, m):
    return (x + m - 1) // m * m


def _detect_vmem_limit():
    """Per-generation VMEM limit: ~3/4 of capacity, capped, 32 MiB fallback."""
    try:
        info = pltpu.get_tpu_info()
        cap = int(getattr(info, "vmem_capacity_bytes", 0) or 0)
        if cap > 0:
            return max(32 << 20, min(cap * 3 // 4, 96 << 20))
    except Exception:
        pass
    return 32 << 20


def _num_tensorcores():
    """Best-effort TensorCore count (2 on megacore/v7x, else 1)."""
    try:
        info = pltpu.get_tpu_info()
        for attr in ("num_cores", "core_count", "num_tensorcores",
                     "tensorcore_count"):
            v = getattr(info, attr, None)
            if v:
                return int(v)
    except Exception:
        pass
    try:
        kind = jax.devices()[0].device_kind.lower()
        if ("v4" in kind) or ("v5p" in kind) or ("7" in kind):
            return 2
    except Exception:
        pass
    return 1


_VMEM_LIMIT = _detect_vmem_limit()
_NUM_TC = _num_tensorcores()


def _cparams(*sem):
    return pltpu.CompilerParams(dimension_semantics=sem,
                                vmem_limit_bytes=_VMEM_LIMIT)


# ----------------------------------------------------------------------------
# Fused complex GEMM kernel (Gauss 3-multiply) + affine (+ optional ReLU).
# Only wr/wi are DMA'd; the Gauss weight sum is formed in-kernel.
# NOTE: Gauss form in bf16 has slightly more cancellation error than the plain
# 4-multiply form; acceptable here (f32 accumulation, untrained-scale weights).
# ----------------------------------------------------------------------------
def _cgemm_kernel(ar_ref, ai_ref, wr_ref, wi_ref, shr_ref, shi_ref,
                  or_ref, oi_ref, *, apply_relu):
    ar = ar_ref[...]
    ai = ai_ref[...]
    wr = wr_ref[...]
    wi = wi_ref[...]
    ws = wr + wi                       # in-kernel Gauss weight sum (VPU)
    asum = ar + ai
    p1 = jnp.dot(ar, wr, preferred_element_type=jnp.float32)
    p2 = jnp.dot(ai, wi, preferred_element_type=jnp.float32)
    p3 = jnp.dot(asum, ws, preferred_element_type=jnp.float32)
    yr = (p1 - p2) + shr_ref[...]
    yi = (p3 - p1 - p2) + shi_ref[...]
    if apply_relu:
        yr = jnp.maximum(yr, 0.0)
        yi = jnp.maximum(yi, 0.0)
    or_ref[...] = yr.astype(or_ref.dtype)
    oi_ref[...] = yi.astype(oi_ref.dtype)


def _m_tiling(M):
    """Pick (Mp, TM) with minimal padding, TM a multiple of 16, TM <= 512."""
    Mp = _round_up(M, 16)
    if Mp <= 512:
        return Mp, Mp
    for tm in range(512, 255, -16):
        if Mp % tm == 0:
            return Mp, tm
    nt = -(-Mp // 512)
    tm = _round_up(-(-Mp // nt), 16)
    return tm * nt, tm


def _cgemm(ar, ai, wr, wi, shr, shi, *, apply_relu, out_dtype):
    """(ar + i*ai) @ (wr + i*wi) with BN affine folded into W and shifts."""
    ar = ar.astype(jnp.bfloat16)
    ai = ai.astype(jnp.bfloat16)
    M, K = ar.shape
    Np = wr.shape[1]
    N = shr.shape[1]

    Mp, TM = _m_tiling(M)
    if Mp != M:
        ar = jnp.pad(ar, ((0, Mp - M), (0, 0)))
        ai = jnp.pad(ai, ((0, Mp - M), (0, 0)))
    nm = Mp // TM

    # N-tile: only split when there is a second TensorCore to feed.
    TN = Np
    if _NUM_TC >= 2 and nm == 1 and Np >= 256:
        half = Np // 2
        TN = half if half % 128 == 0 else 128

    shr_p = jnp.pad(shr, ((0, 0), (0, Np - N)))
    shi_p = jnp.pad(shi, ((0, 0), (0, Np - N)))

    a_spec = pl.BlockSpec((TM, K), lambda i, j: (i, 0))
    w_spec = pl.BlockSpec((K, TN), lambda i, j: (0, j))
    v_spec = pl.BlockSpec((1, TN), lambda i, j: (0, j))
    o_spec = pl.BlockSpec((TM, TN), lambda i, j: (i, j))

    outr, outi = pl.pallas_call(
        functools.partial(_cgemm_kernel, apply_relu=apply_relu),
        out_shape=(jax.ShapeDtypeStruct((Mp, Np), out_dtype),
                   jax.ShapeDtypeStruct((Mp, Np), out_dtype)),
        grid_spec=pltpu.PrefetchScalarGridSpec(
            num_scalar_prefetch=0,
            grid=(nm, Np // TN),
            in_specs=[a_spec, a_spec, w_spec, w_spec, v_spec, v_spec],
            out_specs=[o_spec, o_spec]),
        compiler_params=_cparams("parallel", "parallel"),
    )(ar, ai, wr, wi, shr_p, shi_p)
    return outr[:M, :N], outi[:M, :N]


def _apply_cgemm(p, ar, ai, *, apply_relu, out_dtype=jnp.bfloat16):
    kk_c = p["wr"].shape[0] * p["wr"].shape[1]
    return _cgemm(ar, ai,
                  p["wr"].reshape(kk_c, -1),
                  p["wi"].reshape(kk_c, -1),
                  p["shr"], p["shi"],
                  apply_relu=apply_relu, out_dtype=out_dtype)


# ----------------------------------------------------------------------------
# De-materialized stride-1 conv kernel (3x3 / 5x5 / conv2).
# The padded image is flattened to (Hp*Wp, C); tap (dy,dx) corresponds to a
# contiguous row slice starting at dy*Wp+dx.  Outputs are computed for all Wp
# columns per row ("junk" columns beyond Wo are discarded outside).  One extra
# zero guard row keeps the last tap slice in bounds.
# ----------------------------------------------------------------------------
def _conv_s1_kernel(xr_ref, xi_ref, wr_ref, wi_ref, shr_ref, shi_ref,
                    or_ref, oi_ref, *, kh, kw, M, Wp, apply_relu):
    tn = or_ref.shape[2]
    xr_full = xr_ref[0]
    xi_full = xi_ref[0]
    xs_full = xr_full + xi_full
    accr = jnp.zeros((M, tn), jnp.float32)
    acci = jnp.zeros((M, tn), jnp.float32)
    for dy in range(kh):
        for dx in range(kw):
            t = dy * kw + dx
            s0 = dy * Wp + dx
            ar = xr_full[s0:s0 + M, :]
            ai = xi_full[s0:s0 + M, :]
            asm = xs_full[s0:s0 + M, :]
            wr = wr_ref[t]
            wi = wi_ref[t]
            ws = wr + wi               # small per-tap VPU add (C x TN)
            p1 = jnp.dot(ar, wr, preferred_element_type=jnp.float32)
            p2 = jnp.dot(ai, wi, preferred_element_type=jnp.float32)
            p3 = jnp.dot(asm, ws, preferred_element_type=jnp.float32)
            accr = accr + (p1 - p2)
            acci = acci + (p3 - p1 - p2)
    yr = accr + shr_ref[...]
    yi = acci + shi_ref[...]
    if apply_relu:
        yr = jnp.maximum(yr, 0.0)
        yi = jnp.maximum(yi, 0.0)
    or_ref[0] = yr.astype(or_ref.dtype)
    oi_ref[0] = yi.astype(oi_ref.dtype)


def _conv_tn(Np, M):
    """N-tile for conv_s1: largest tile that fits the VMEM budget; ensure
    >=2 grid iterations on multi-TC chips when Np allows it."""
    budget = max(_VMEM_LIMIT - (8 << 20), 16 << 20)
    tn = Np
    while tn > 128 and 32 * M * tn > budget:
        tn //= 2
    if tn % 128:
        tn = 128
    if _NUM_TC >= 2 and Np >= 256 and Np // tn < 2:
        half = Np // 2
        tn = half if half % 128 == 0 else 128
    return tn


def complex_conv_s1(p, xr, xi, *, ksize, padding):
    """Stride-1 complex conv + BN affine + ReLU without materialized im2col."""
    kh = kw = ksize
    ph = pw = padding
    B, H, W, C = xr.shape
    Np = p["wr"].shape[2]
    N = p["shr"].shape[1]
    Hp, Wp = H + 2 * ph, W + 2 * pw
    Ho, Wo = Hp - kh + 1, Wp - kw + 1
    M = Ho * Wp                       # flattened rows incl. per-row junk cols
    L = (Hp + 1) * Wp                 # one extra zero guard row at the bottom

    def prep(x):
        xp = jnp.pad(x.astype(jnp.bfloat16),
                     ((0, 0), (ph, ph + 1), (pw, pw), (0, 0)))
        return xp.reshape(B, L, C)

    xrp, xip = prep(xr), prep(xi)
    TN = _conv_tn(Np, M)
    shr_p = jnp.pad(p["shr"], ((0, 0), (0, Np - N)))
    shi_p = jnp.pad(p["shi"], ((0, 0), (0, Np - N)))

    x_spec = pl.BlockSpec((1, L, C), lambda b, j: (b, 0, 0))
    w_spec = pl.BlockSpec((kh * kw, C, TN), lambda b, j: (0, 0, j))
    v_spec = pl.BlockSpec((1, TN), lambda b, j: (0, j))
    o_spec = pl.BlockSpec((1, M, TN), lambda b, j: (b, 0, j))

    yr, yi = pl.pallas_call(
        functools.partial(_conv_s1_kernel, kh=kh, kw=kw, M=M, Wp=Wp,
                          apply_relu=True),
        out_shape=(jax.ShapeDtypeStruct((B, M, Np), jnp.bfloat16),
                   jax.ShapeDtypeStruct((B, M, Np), jnp.bfloat16)),
        grid_spec=pltpu.PrefetchScalarGridSpec(
            num_scalar_prefetch=0,
            grid=(B, Np // TN),
            in_specs=[x_spec, x_spec, w_spec, w_spec, v_spec, v_spec],
            out_specs=[o_spec, o_spec]),
        compiler_params=_cparams("parallel", "parallel"),
    )(xrp, xip, p["wr"], p["wi"], shr_p, shi_p)

    yr = yr.reshape(B, Ho, Wp, Np)[:, :, :Wo, :N]
    yi = yi.reshape(B, Ho, Wp, Np)[:, :, :Wo, :N]
    return yr, yi


# ----------------------------------------------------------------------------
# Pooling kernel: real and imag are separate inputs/outputs (no HBM concat).
# Separable k*k reduction (W taps then H taps).  Stride-2 subsample along H is
# done in-kernel with a layout-safe major-dim reshape; the W subsample (stride
# along the sublane dim) stays a cheap XLA slice on the already half-size
# result.
# TODO(synk): also fold the W subsample into the kernel (needs a sublane-split
# relayout or strided VMEM loads).
# ----------------------------------------------------------------------------
def _pool_kernel(xr_ref, xi_ref, or_ref, oi_ref, *, kh, kw, sh, mode):
    Ho, Wt = or_ref.shape[1], or_ref.shape[2]
    Ht = sh * Ho

    def reduce_one(x):
        if mode == "max":
            accw = x[:, 0:Wt, :]
            for dx in range(1, kw):
                accw = jnp.maximum(accw, x[:, dx:dx + Wt, :])
            acc = accw[0:Ht]
            for dy in range(1, kh):
                acc = jnp.maximum(acc, accw[dy:dy + Ht])
        else:
            accw = x[:, 0:Wt, :].astype(jnp.float32)
            for dx in range(1, kw):
                accw = accw + x[:, dx:dx + Wt, :].astype(jnp.float32)
            acc = accw[0:Ht]
            for dy in range(1, kh):
                acc = acc + accw[dy:dy + Ht]
            acc = acc * (1.0 / (kh * kw))
        if sh > 1:
            # keep only every sh-th output row (major-dim reshape: layout-safe)
            acc = acc.reshape(Ho, sh, Wt, acc.shape[-1])[:, 0]
        return acc

    or_ref[0] = reduce_one(xr_ref[0]).astype(or_ref.dtype)
    oi_ref[0] = reduce_one(xi_ref[0]).astype(oi_ref.dtype)


def complex_pool(xr, xi, *, kernel, stride, padding, mode):
    kh = kw = kernel
    sh = sw = stride
    B, H, W, C = xr.shape
    Ho = (H + 2 * padding - kh) // sh + 1
    Wo = (W + 2 * padding - kw) // sw + 1
    pad_val = -3e38 if mode == "max" else 0.0
    extra_h = max(0, (sh * Ho + kh - 1) - (H + 2 * padding))
    if padding or extra_h:
        cfg = ((0, 0), (padding, padding + extra_h), (padding, padding), (0, 0))
        xrp = jnp.pad(xr, cfg, constant_values=pad_val)
        xip = jnp.pad(xi, cfg, constant_values=pad_val)
    else:
        xrp, xip = xr, xi
    Hp, Wp = xrp.shape[1], xrp.shape[2]
    Wt = Wp - kw + 1                  # stride-1 width of the W reduction

    x_spec = pl.BlockSpec((1, Hp, Wp, C), lambda b: (b, 0, 0, 0))
    o_spec = pl.BlockSpec((1, Ho, Wt, C), lambda b: (b, 0, 0, 0))
    yr, yi = pl.pallas_call(
        functools.partial(_pool_kernel, kh=kh, kw=kw, sh=sh, mode=mode),
        out_shape=(jax.ShapeDtypeStruct((B, Ho, Wt, C), xr.dtype),
                   jax.ShapeDtypeStruct((B, Ho, Wt, C), xi.dtype)),
        grid_spec=pltpu.PrefetchScalarGridSpec(
            num_scalar_prefetch=0,
            grid=(B,),
            in_specs=[x_spec, x_spec],
            out_specs=[o_spec, o_spec]),
        compiler_params=_cparams("parallel"),
    )(xrp, xip)
    if sw > 1:
        yr = yr[:, :, 0:sw * (Wo - 1) + 1:sw, :]
        yi = yi[:, :, 0:sw * (Wo - 1) + 1:sw, :]
    else:
        yr = yr[:, :, :Wo, :]
        yi = yi[:, :, :Wo, :]
    return yr, yi


# ----------------------------------------------------------------------------
# GEMM-path convolutions (1x1 convs, the strided 7x7 stem, final linear)
# ----------------------------------------------------------------------------
def complex_conv_1x1(p, xr, xi):
    B, H, W, C = xr.shape
    yr, yi = _apply_cgemm(p, xr.reshape(-1, C), xi.reshape(-1, C),
                          apply_relu=True)
    N = yr.shape[1]
    return yr.reshape(B, H, W, N), yi.reshape(B, H, W, N)


def _extract_patches(x, kh, kw, sh, sw, ph, pw):
    B, H, W, C = x.shape
    xp = jnp.pad(x, ((0, 0), (ph, ph), (pw, pw), (0, 0)))
    Ho = (H + 2 * ph - kh) // sh + 1
    Wo = (W + 2 * pw - kw) // sw + 1
    pats = []
    for dy in range(kh):
        for dx in range(kw):
            pats.append(xp[:, dy:dy + sh * (Ho - 1) + 1:sh,
                           dx:dx + sw * (Wo - 1) + 1:sw, :])
    a = jnp.stack(pats, axis=3)                    # (B, Ho, Wo, KK, C)
    return a.reshape(B * Ho * Wo, kh * kw * C), Ho, Wo


def complex_conv_strided(p, xr, xi, *, ksize, stride, padding):
    """Strided conv via im2col GEMM (only used for the 7x7/s2 stem, cin=3).
    TODO(synk): replace the XLA im2col with a direct stride-2 Pallas kernel."""
    kh, kw = ksize
    sh, sw = stride
    ph, pw = padding
    B = xr.shape[0]
    ar, Ho, Wo = _extract_patches(xr.astype(jnp.bfloat16), kh, kw, sh, sw, ph, pw)
    ai, _, _ = _extract_patches(xi.astype(jnp.bfloat16), kh, kw, sh, sw, ph, pw)
    yr, yi = _apply_cgemm(p, ar, ai, apply_relu=True)
    N = yr.shape[1]
    return yr.reshape(B, Ho, Wo, N), yi.reshape(B, Ho, Wo, N)


# ----------------------------------------------------------------------------
# Inception block
# ----------------------------------------------------------------------------
INCEPTION_CFG = dict(
    inc3a=(192, 64, 96, 128, 16, 32, 32),
    inc3b=(256, 128, 128, 192, 32, 96, 64),
    inc4a=(480, 192, 96, 208, 16, 48, 64),
    inc4b=(512, 160, 112, 224, 24, 64, 64),
    inc4c=(512, 128, 128, 256, 24, 64, 64),
    inc4d=(512, 112, 144, 288, 32, 64, 64),
    inc4e=(528, 256, 160, 320, 32, 128, 128),
    inc5a=(832, 256, 160, 320, 32, 128, 128),
    inc5b=(832, 384, 192, 384, 48, 128, 128),
)


def apply_inception(p, xr, xi, cfg):
    _, o1, red3, _, red5, _, _ = cfg
    B, H, W, C = xr.shape
    # The three 1x1 branches sharing the same input run as one fused GEMM.
    # TODO(synk): emit the fused GEMM with three separate (per-branch padded)
    # outputs to avoid the XLA slice copies below.
    fr, fi = _apply_cgemm(p["b123"], xr.reshape(-1, C), xi.reshape(-1, C),
                          apply_relu=True)

    def tile(t, lo, hi):
        return t[:, lo:hi].reshape(B, H, W, hi - lo)

    b1r, b1i = tile(fr, 0, o1), tile(fi, 0, o1)
    t2r, t2i = tile(fr, o1, o1 + red3), tile(fi, o1, o1 + red3)
    t3r, t3i = (tile(fr, o1 + red3, o1 + red3 + red5),
                tile(fi, o1 + red3, o1 + red3 + red5))

    b2r, b2i = complex_conv_s1(p["b2b"], t2r, t2i, ksize=3, padding=1)
    b3r, b3i = complex_conv_s1(p["b3b"], t3r, t3i, ksize=5, padding=2)

    p4r, p4i = complex_pool(xr, xi, kernel=3, stride=1, padding=1, mode="max")
    b4r, b4i = complex_conv_1x1(p["b4"], p4r, p4i)

    yr = jnp.concatenate([b1r, b2r, b3r, b4r], axis=-1)
    yi = jnp.concatenate([b1i, b2i, b3i, b4i], axis=-1)
    return yr, yi


# ----------------------------------------------------------------------------
# Parameters (deterministic init; BN stats / scale folded in at init time)
# ----------------------------------------------------------------------------
def _raw_cconv(key, cin, cout, kh, kw):
    k1, k2, k3, k4 = jax.random.split(key, 4)
    std = 1.0 / math.sqrt(2.0 * cin * kh * kw)
    wr = jax.random.normal(k1, (kh, kw, cin, cout), jnp.float32) * std
    wi = jax.random.normal(k2, (kh, kw, cin, cout), jnp.float32) * std
    br = jax.random.normal(k3, (cout,), jnp.float32) * 0.01
    bi = jax.random.normal(k4, (cout,), jnp.float32) * 0.01
    return wr, wi, br, bi


def _pack_params(wr, wi, br, bi, *, with_bn=True):
    """Fold BN (eval, default stats) into W/shifts, pad N to 128, cast bf16.
    NOTE: for trained BN this fold generalizes to a per-channel scale folded
    into the weight columns and a per-channel shift (same kernel interface)."""
    kh, kw, cin, cout = wr.shape
    s = 1.0 / math.sqrt(1.0 + _BN_EPS) if with_bn else 1.0
    np_ = _round_up(cout, 128)

    def prep(w):
        w = (w * s).reshape(kh * kw, cin, cout)
        w = jnp.pad(w, ((0, 0), (0, 0), (0, np_ - cout)))
        return w.astype(jnp.bfloat16)

    return dict(
        wr=prep(wr), wi=prep(wi),
        shr=((br - bi) * s).reshape(1, cout).astype(jnp.float32),
        shi=((br + bi) * s).reshape(1, cout).astype(jnp.float32),
    )


def init_conv_block(key, cin, cout, kh, kw):
    return _pack_params(*_raw_cconv(key, cin, cout, kh, kw), with_bn=True)


def init_inception(key, cfg):
    cin, o1, red3, o3, red5, o5, opool = cfg
    ks = jax.random.split(key, 6)
    raw1 = _raw_cconv(ks[0], cin, o1, 1, 1)
    raw2 = _raw_cconv(ks[1], cin, red3, 1, 1)
    raw3 = _raw_cconv(ks[3], cin, red5, 1, 1)
    fused = tuple(jnp.concatenate(ts, axis=-1) for ts in zip(raw1, raw2, raw3))
    return dict(
        b123=_pack_params(*fused, with_bn=True),
        b2b=init_conv_block(ks[2], red3, o3, 3, 3),
        b3b=init_conv_block(ks[4], red5, o5, 5, 5),
        b4=init_conv_block(ks[5], cin, opool, 1, 1),
    )


def init_googlenet(key, num_classes):
    keys = jax.random.split(key, 12)
    p = dict(
        conv1=init_conv_block(keys[0], 3, 64, 7, 7),
        conv2=init_conv_block(keys[1], 64, 192, 3, 3),
    )
    for i, name in enumerate(INCEPTION_CFG):
        p[name] = init_inception(keys[2 + i], INCEPTION_CFG[name])
    k1, k2, k3, k4 = jax.random.split(keys[11], 4)
    std = 1.0 / math.sqrt(2.0 * 1024)
    fc_wr = jax.random.normal(k1, (1, 1, 1024, num_classes), jnp.float32) * std
    fc_wi = jax.random.normal(k2, (1, 1, 1024, num_classes), jnp.float32) * std
    fc_br = jax.random.normal(k3, (num_classes,), jnp.float32) * 0.01
    fc_bi = jax.random.normal(k4, (num_classes,), jnp.float32) * 0.01
    p["fc"] = _pack_params(fc_wr, fc_wi, fc_br, fc_bi, with_bn=False)
    return p


# ----------------------------------------------------------------------------
# Forward pass (eval mode: dropout = identity, aux heads not executed)
# ----------------------------------------------------------------------------
def googlenet_forward(params, xr, xi):
    xr = xr.astype(jnp.bfloat16)
    xi = xi.astype(jnp.bfloat16)
    xr, xi = complex_conv_strided(params["conv1"], xr, xi,
                                  ksize=(7, 7), stride=(2, 2), padding=(3, 3))
    xr, xi = complex_pool(xr, xi, kernel=3, stride=2, padding=1, mode="max")
    xr, xi = complex_conv_s1(params["conv2"], xr, xi, ksize=3, padding=1)
    xr, xi = complex_pool(xr, xi, kernel=3, stride=2, padding=1, mode="max")
    xr, xi = apply_inception(params["inc3a"], xr, xi, INCEPTION_CFG["inc3a"])
    xr, xi = apply_inception(params["inc3b"], xr, xi, INCEPTION_CFG["inc3b"])
    xr, xi = complex_pool(xr, xi, kernel=3, stride=2, padding=1, mode="max")
    for name in ("inc4a", "inc4b", "inc4c", "inc4d", "inc4e"):
        xr, xi = apply_inception(params[name], xr, xi, INCEPTION_CFG[name])
    xr, xi = complex_pool(xr, xi, kernel=3, stride=2, padding=1, mode="max")
    xr, xi = apply_inception(params["inc5a"], xr, xi, INCEPTION_CFG["inc5a"])
    xr, xi = apply_inception(params["inc5b"], xr, xi, INCEPTION_CFG["inc5b"])
    xr, xi = complex_pool(xr, xi, kernel=7, stride=1, padding=0, mode="avg")
    B = xr.shape[0]
    fr = xr.reshape(B, -1)
    fi = xi.reshape(B, -1)
    yr, yi = _apply_cgemm(params["fc"], fr, fi, apply_relu=False,
                          out_dtype=jnp.float32)
    return jnp.stack([yr, yi], axis=-1)            # (B, num_classes, 2)


if __name__ == "__main__":
    num_classes = 16
    B = 1
    key = jax.random.PRNGKey(0)
    kp, kx = jax.random.split(key)
    params = init_googlenet(kp, num_classes)

    # torch input is (B, 3, 224, 224, 2) NCHW + complex dim; build NHWC parts
    x = jax.random.normal(kx, (B, 3, 224, 224, 2), jnp.float32)
    xr = jnp.transpose(x[..., 0], (0, 2, 3, 1))
    xi = jnp.transpose(x[..., 1], (0, 2, 3, 1))

    # --- self-check 1: fused complex GEMM kernel vs reference (bf16 numerics)
    ks = jax.random.split(jax.random.PRNGKey(1), 6)
    M, K, N = 40, 96, 48
    a_r = jax.random.normal(ks[0], (M, K), jnp.float32)
    a_i = jax.random.normal(ks[1], (M, K), jnp.float32)
    t_wr = jax.random.normal(ks[2], (1, 1, K, N), jnp.float32) * 0.1
    t_wi = jax.random.normal(ks[3], (1, 1, K, N), jnp.float32) * 0.1
    t_br = jax.random.normal(ks[4], (N,), jnp.float32) * 0.01
    t_bi = jax.random.normal(ks[5], (N,), jnp.float32) * 0.01
    tp = _pack_params(t_wr, t_wi, t_br, t_bi, with_bn=False)
    gr, gi = _apply_cgemm(tp, a_r.astype(jnp.bfloat16), a_i.astype(jnp.bfloat16),
                          apply_relu=True, out_dtype=jnp.float32)
    arb = a_r.astype(jnp.bfloat16).astype(jnp.float32)
    aib = a_i.astype(jnp.bfloat16).astype(jnp.float32)
    wrb = t_wr[0, 0].astype(jnp.bfloat16).astype(jnp.float32)
    wib = t_wi[0, 0].astype(jnp.bfloat16).astype(jnp.float32)
    rr = jnp.maximum(arb @ wrb - aib @ wib + (t_br - t_bi), 0.0)
    ri = jnp.maximum(arb @ wib + aib @ wrb + (t_br + t_bi), 0.0)
    assert jnp.allclose(gr, rr, atol=1e-1, rtol=1e-1)
    assert jnp.allclose(gi, ri, atol=1e-1, rtol=1e-1)

    # --- self-check 2: de-materialized 3x3 conv kernel vs patch-GEMM reference
    ksc = jax.random.split(jax.random.PRNGKey(2), 2)
    cx_r = jax.random.normal(ksc[0], (1, 8, 8, 8), jnp.float32)
    cx_i = jax.random.normal(ksc[1], (1, 8, 8, 8), jnp.float32)
    cp = init_conv_block(jax.random.PRNGKey(3), 8, 8, 3, 3)
    cr, ci = complex_conv_s1(cp, cx_r.astype(jnp.bfloat16),
                             cx_i.astype(jnp.bfloat16), ksize=3, padding=1)
    pr, _, _ = _extract_patches(cx_r.astype(jnp.bfloat16), 3, 3, 1, 1, 1, 1)
    pi, _, _ = _extract_patches(cx_i.astype(jnp.bfloat16), 3, 3, 1, 1, 1, 1)
    w_r = cp["wr"].reshape(9 * 8, -1)[:, :8].astype(jnp.float32)
    w_i = cp["wi"].reshape(9 * 8, -1)[:, :8].astype(jnp.float32)
    prf = pr.astype(jnp.float32)
    pif = pi.astype(jnp.float32)
    ref_r = jnp.maximum(prf @ w_r - pif @ w_i + cp["shr"][0], 0.0).reshape(1, 8, 8, 8)
    ref_i = jnp.maximum(prf @ w_i + pif @ w_r + cp["shi"][0], 0.0).reshape(1, 8, 8, 8)
    assert jnp.allclose(cr.astype(jnp.float32), ref_r, atol=1e-1, rtol=1e-1)
    assert jnp.allclose(ci.astype(jnp.float32), ref_i, atol=1e-1, rtol=1e-1)

    # --- full forward ---
    fwd = jax.jit(googlenet_forward)
    out = jax.block_until_ready(fwd(params, xr, xi))
    assert out.shape == (B, num_classes, 2), out.shape
    assert bool(jnp.all(jnp.isfinite(out)))
    print("KERNEL_OK")
</pallas_src>

<mosaic_0001>
module attributes {stable_mosaic.version = 11 : i64} {
  func.func @_cgemm_kernel(%arg0: i32, %arg1: i32, %arg2: memref<48x96xbf16, #tpu.memory_space<vmem>>, %arg3: memref<48x96xbf16, #tpu.memory_space<vmem>>, %arg4: memref<96x128xbf16, #tpu.memory_space<vmem>>, %arg5: memref<96x128xbf16, #tpu.memory_space<vmem>>, %arg6: memref<1x128xf32, #tpu.memory_space<vmem>>, %arg7: memref<1x128xf32, #tpu.memory_space<vmem>>, %arg8: memref<48x128xf32, #tpu.memory_space<vmem>>, %arg9: memref<48x128xf32, #tpu.memory_space<vmem>>) attributes {dimension_semantics = [#tpu.dimension_semantics<parallel>, #tpu.dimension_semantics<parallel>], iteration_bounds = array<i64: 1, 1>, scalar_prefetch = 0 : i64, scratch_operands = 0 : i64, tpu.core_type = #tpu.core_type<tc>, window_params = [{transform_indices = @transform_0, window_bounds = array<i64: 48, 96>}, {transform_indices = @transform_1, window_bounds = array<i64: 48, 96>}, {transform_indices = @transform_2, window_bounds = array<i64: 96, 128>}, {transform_indices = @transform_3, window_bounds = array<i64: 96, 128>}, {transform_indices = @transform_4, window_bounds = array<i64: 1, 128>}, {transform_indices = @transform_5, window_bounds = array<i64: 1, 128>}, {transform_indices = @transform_6, window_bounds = array<i64: 48, 128>}, {transform_indices = @transform_7, window_bounds = array<i64: 48, 128>}]} {
    %c0 = arith.constant 0 : index
    %c0_0 = arith.constant 0 : index
    %0 = vector.load %arg2[%c0, %c0_0] : memref<48x96xbf16, #tpu.memory_space<vmem>>, vector<48x96xbf16>
    %c0_1 = arith.constant 0 : index
    %c0_2 = arith.constant 0 : index
    %1 = vector.load %arg3[%c0_1, %c0_2] : memref<48x96xbf16, #tpu.memory_space<vmem>>, vector<48x96xbf16>
    %c0_3 = arith.constant 0 : index
    %c0_4 = arith.constant 0 : index
    %2 = vector.load %arg4[%c0_3, %c0_4] : memref<96x128xbf16, #tpu.memory_space<vmem>>, vector<96x128xbf16>
    %c0_5 = arith.constant 0 : index
    %c0_6 = arith.constant 0 : index
    %3 = vector.load %arg5[%c0_5, %c0_6] : memref<96x128xbf16, #tpu.memory_space<vmem>>, vector<96x128xbf16>
    %4 = arith.addf %2, %3 : vector<96x128xbf16>
    %5 = arith.addf %0, %1 : vector<48x96xbf16>
    %cst = arith.constant dense<0.000000e+00> : vector<48x128xf32>
    %6 = tpu.matmul %0, %2, %cst {dimension_numbers = #tpu.dot_dimension_numbers<[1], [0], [0], [1], [0, 0, 1, 1], [], []>} : vector<48x96xbf16>, vector<96x128xbf16>, vector<48x128xf32> -> vector<48x128xf32>
    %cst_7 = arith.constant dense<0.000000e+00> : vector<48x128xf32>
    %7 = tpu.matmul %1, %3, %cst_7 {dimension_numbers = #tpu.dot_dimension_numbers<[1], [0], [0], [1], [0, 0, 1, 1], [], []>} : vector<48x96xbf16>, vector<96x128xbf16>, vector<48x128xf32> -> vector<48x128xf32>
    %cst_8 = arith.constant dense<0.000000e+00> : vector<48x128xf32>
    %8 = tpu.matmul %5, %4, %cst_8 {dimension_numbers = #tpu.dot_dimension_numbers<[1], [0], [0], [1], [0, 0, 1, 1], [], []>} : vector<48x96xbf16>, vector<96x128xbf16>, vector<48x128xf32> -> vector<48x128xf32>
    %9 = arith.subf %6, %7 : vector<48x128xf32>
    %c0_9 = arith.constant 0 : index
    %c0_10 = arith.constant 0 : index
    %10 = vector.load %arg6[%c0_9, %c0_10] : memref<1x128xf32, #tpu.memory_space<vmem>>, vector<1x128xf32>
    %11 = vector.broadcast %10 : vector<1x128xf32> to vector<48x128xf32>
    %12 = arith.addf %9, %11 : vector<48x128xf32>
    %13 = arith.subf %8, %6 : vector<48x128xf32>
    %14 = arith.subf %13, %7 : vector<48x128xf32>
    %c0_11 = arith.constant 0 : index
    %c0_12 = arith.constant 0 : index
    %15 = vector.load %arg7[%c0_11, %c0_12] : memref<1x128xf32, #tpu.memory_space<vmem>>, vector<1x128xf32>
    %16 = vector.broadcast %15 : vector<1x128xf32> to vector<48x128xf32>
    %17 = arith.addf %14, %16 : vector<48x128xf32>
    %cst_13 = arith.constant 0.000000e+00 : f32
    %18 = vector.broadcast %cst_13 : f32 to vector<48x128xf32>
    %19 = arith.maximumf %12, %18 : vector<48x128xf32>
    %cst_14 = arith.constant 0.000000e+00 : f32
    %20 = vector.broadcast %cst_14 : f32 to vector<48x128xf32>
    %21 = arith.maximumf %17, %20 : vector<48x128xf32>
    %c0_15 = arith.constant 0 : index
    %c0_16 = arith.constant 0 : index
    %22 = vector.load %arg8[%c0_15, %c0_16] : memref<48x128xf32, #tpu.memory_space<vmem>>, vector<48x128xf32>
    tpu.vector_store %arg8[%c0_15, %c0_16], %19 {strides = array<i32>} : memref<48x128xf32, #tpu.memory_space<vmem>>, vector<48x128xf32>,
    %c0_17 = arith.constant 0 : index
    %c0_18 = arith.constant 0 : index
    %23 = vector.load %arg9[%c0_17, %c0_18] : memref<48x128xf32, #tpu.memory_space<vmem>>, vector<48x128xf32>
    tpu.vector_store %arg9[%c0_17, %c0_18], %21 {strides = array<i32>} : memref<48x128xf32, #tpu.memory_space<vmem>>, vector<48x128xf32>,
    return
  }
  func.func @transform_0(%arg0: i32, %arg1: i32) -> (i32, i32) {
    %c0_i32 = arith.constant 0 : i32
    %c0_i32_0 = arith.constant 0 : i32
    return %arg0, %c0_i32 : i32, i32
  }
  func.func @transform_1(%arg0: i32, %arg1: i32) -> (i32, i32) {
    %c0_i32 = arith.constant 0 : i32
    %c0_i32_0 = arith.constant 0 : i32
    return %arg0, %c0_i32 : i32, i32
  }
  func.func @transform_2(%arg0: i32, %arg1: i32) -> (i32, i32) {
    %c0_i32 = arith.constant 0 : i32
    %c0_i32_0 = arith.constant 0 : i32
    return %c0_i32, %arg1 : i32, i32
  }
  func.func @transform_3(%arg0: i32, %arg1: i32) -> (i32, i32) {
    %c0_i32 = arith.constant 0 : i32
    %c0_i32_0 = arith.constant 0 : i32
    return %c0_i32, %arg1 : i32, i32
  }
  func.func @transform_4(%arg0: i32, %arg1: i32) -> (i32, i32) {
    %c0_i32 = arith.constant 0 : i32
    %c0_i32_0 = arith.constant 0 : i32
    return %c0_i32, %arg1 : i32, i32
  }
  func.func @transform_5(%arg0: i32, %arg1: i32) -> (i32, i32) {
    %c0_i32 = arith.constant 0 : i32
    %c0_i32_0 = arith.constant 0 : i32
    return %c0_i32, %arg1 : i32, i32
  }
  func.func @transform_6(%arg0: i32, %arg1: i32) -> (i32, i32) {
    %c0_i32 = arith.constant 0 : i32
    return %arg0, %arg1 : i32, i32
  }
  func.func @transform_7(%arg0: i32, %arg1: i32) -> (i32, i32) {
    %c0_i32 = arith.constant 0 : i32
    return %arg0, %arg1 : i32, i32
  }
}

</mosaic_0001>

<llo_original>
// kernel: tpu_custom_call.1
$region0: #{tpu_custom_call.1}
  #allocation0 [shape = 'u32[]', space=smem, size = 0x4, offset = 0x4, fixed_abs, tag = 'smem constant byte address 0x4 - core index']
  #allocation1 [shape = 'u32[144,128]{1,0:T(1,128)}', space=vmem, size = 0x12000, scoped, tag = 'internal scratch']
  %s0 = inlined_call_operand.hbm [shape: bf16[48,96], index: 0, kind: input, shape index: {}]
  %s1 = inlined_call_operand.hbm [shape: bf16[48,96], index: 1, kind: input, shape index: {}]
  %s2 = inlined_call_operand.hbm [shape: bf16[96,128], index: 2, kind: input, shape index: {}]
  %s3 = inlined_call_operand.hbm [shape: bf16[96,128], index: 3, kind: input, shape index: {}]
  %s4 = inlined_call_operand.vmem [shape: f32[1,128], index: 4, kind: input, shape index: {}]
  %s5 = inlined_call_operand.vmem [shape: f32[1,128], index: 5, kind: input, shape index: {}]
  %s6 = inlined_call_operand.hbm [shape: f32[48,128], index: 6, kind: output, shape index: {0}]
  %s7 = inlined_call_operand.hbm [shape: f32[48,128], index: 7, kind: output, shape index: {1}]
  %8 = xla_tuple %s6, %s7
  %s9 = sld [smem:[#allocation0]]
  $region58: #{tpu_custom_call.1} parent=0
    _
  %s11 = ssub.s32 1, %s9
  %s12 = scalar_select 0, %s11, %s9
  $region1: #{tpu_custom_call.1} parent=0
    #allocation2 [shape = 'u8[12288]{0}', space=vmem, size = 0x3000, scoped, tag = 'input window, operand 0, single buffered']
    #allocation3 [shape = 's32[1]{0}', space=sflag, size = 0x4, scoped, tag = 'scoped memory for tpu_custom_call.1']
    #allocation4 [shape = 's32[1]{0}', space=sflag, size = 0x4, scoped, tag = 'scoped memory for tpu_custom_call.1']
    #allocation5 [shape = 'u8[12288]{0}', space=vmem, size = 0x3000, scoped, tag = 'input window, operand 1, single buffered']
    #allocation6 [shape = 's32[1]{0}', space=sflag, size = 0x4, scoped, tag = 'scoped memory for tpu_custom_call.1']
    #allocation7 [shape = 'u8[24576]{0}', space=vmem, size = 0x6000, scoped, tag = 'input window, operand 2, single buffered']
    #allocation8 [shape = 'u8[24576]{0}', space=vmem, size = 0x6000, scoped, tag = 'input window, operand 3, single buffered']
    #allocation9 [shape = 's32[1]{0}', space=sflag, size = 0x4, scoped, tag = 'scoped memory for tpu_custom_call.1']
    #allocation10 [shape = 'u8[24576]{0}', space=vmem, size = 0x6000, scoped, tag = 'output window, operand 0, single buffered']
    #allocation11 [shape = 'u8[24576]{0}', space=vmem, size = 0x6000, scoped, tag = 'output window, operand 1, single buffered']
    #allocation12 [shape = 's32[1]{0}', space=sflag, size = 0x4, scoped, tag = 'scoped memory for tpu_custom_call.1']
    %13 = vsyncpa [#allocation3], 0
    %14 = vsyncpa [#allocation6], 0
    %15 = vsyncpa [#allocation9], 0
    %16 = vsyncpa [#allocation4], 0
    %17 = vsyncpa [#allocation12], 0
    // Predicated region
    $region2: #{tpu_custom_call.1} parent=1 // pred_check
      _
    $region3: #{tpu_custom_call.1} parent=1 // pred_check_branch
      %19 = sbr.rel (0) target = $region5
    $region4: #{tpu_custom_call.1} parent=1 // pred_region
      %s21 = ssub.s32 384, 384
      %22 = vsyncadd [#allocation3], %s21
      %s23 = sshll.u32 [#allocation2], 4
      %s24 = int_to_ptr.vmem [resolvable:$true] %s23
      %29 = dma.hbm_to_vmem [thread:$0]  %s0, 384, %s24, [#allocation3], 64, 64, 4
    $region5: #{tpu_custom_call.1} parent=1 // pred_fallthru
      _
    // Predicated region
    $region6: #{tpu_custom_call.1} parent=1 // pred_check
      _
    $region7: #{tpu_custom_call.1} parent=1 // pred_check_branch
      %31 = sbr.rel (0) target = $region9
    $region8: #{tpu_custom_call.1} parent=1 // pred_region
      %s33 = ssub.s32 384, 384
      %34 = vsyncadd [#allocation6], %s33
      %s35 = sshll.u32 [#allocation5], 4
      %s36 = int_to_ptr.vmem [resolvable:$true] %s35
      %41 = dma.hbm_to_vmem [thread:$0]  %s1, 384, %s36, [#allocation6], 64, 64, 4
    $region9: #{tpu_custom_call.1} parent=1 // pred_fallthru
      _
    // Predicated region
    $region10: #{tpu_custom_call.1} parent=1 // pred_check
      _
    $region11: #{tpu_custom_call.1} parent=1 // pred_check_branch
      %43 = sbr.rel (0) target = $region13
    $region12: #{tpu_custom_call.1} parent=1 // pred_region
      %s45 = ssub.s32 768, 768
      %46 = vsyncadd [#allocation6], %s45
      %s47 = sshll.u32 [#allocation7], 4
      %s48 = int_to_ptr.vmem [resolvable:$true] %s47
      %53 = dma.hbm_to_vmem [thread:$0]  %s2, 768, %s48, [#allocation6], 64, 64, 4
    $region13: #{tpu_custom_call.1} parent=1 // pred_fallthru
      _
    // Predicated region
    $region14: #{tpu_custom_call.1} parent=1 // pred_check
      _
    $region15: #{tpu_custom_call.1} parent=1 // pred_check_branch
      %55 = sbr.rel (0) target = $region17
    $region16: #{tpu_custom_call.1} parent=1 // pred_region
      %s57 = ssub.s32 768, 768
      %58 = vsyncadd [#allocation9], %s57
      %s59 = sshll.u32 [#allocation8], 4
      %s60 = int_to_ptr.vmem [resolvable:$true] %s59
      %65 = dma.hbm_to_vmem [thread:$0]  %s3, 768, %s60, [#allocation9], 64, 64, 4
    $region17: #{tpu_custom_call.1} parent=1 // pred_fallthru
      _
    // Predicated region
    $region18: #{tpu_custom_call.1} parent=1 // pred_check
      _
    $region19: #{tpu_custom_call.1} parent=1 // pred_check_branch
      %67 = sbr.rel (0) target = $region21
    $region20: #{tpu_custom_call.1} parent=1 // pred_region
      _
    $region21: #{tpu_custom_call.1} parent=1 // pred_fallthru
      _
    // Predicated region
    $region22: #{tpu_custom_call.1} parent=1 // pred_check
      _
    $region23: #{tpu_custom_call.1} parent=1 // pred_check_branch
      %69 = sbr.rel (0) target = $region25
    $region24: #{tpu_custom_call.1} parent=1 // pred_region
      _
    $region25: #{tpu_custom_call.1} parent=1 // pred_fallthru
      _
    // Predicated region
    $region26: #{tpu_custom_call.1} parent=1 // pred_check
      _
    $region27: #{tpu_custom_call.1} parent=1 // pred_check_branch
      %71 = sbr.rel (0) target = $region29
    $region28: #{tpu_custom_call.1} parent=1 // pred_region
      %72 = dma.done [#allocation3], 384
    $region29: #{tpu_custom_call.1} parent=1 // pred_fallthru
      _
    // Predicated region
    $region30: #{tpu_custom_call.1} parent=1 // pred_check
      _
    $region31: #{tpu_custom_call.1} parent=1 // pred_check_branch
      %74 = sbr.rel (0) target = $region33
    $region32: #{tpu_custom_call.1} parent=1 // pred_region
      %75 = dma.done [#allocation6], 384
    $region33: #{tpu_custom_call.1} parent=1 // pred_fallthru
      _
    // Predicated region
    $region34: #{tpu_custom_call.1} parent=1 // pred_check
      _
    $region35: #{tpu_custom_call.1} parent=1 // pred_check_branch
      %77 = sbr.rel (0) target = $region37
    $region36: #{tpu_custom_call.1} parent=1 // pred_region
      %78 = dma.done [#allocation6], 768
    $region37: #{tpu_custom_call.1} parent=1 // pred_fallthru
      _
    // Predicated region
    $region38: #{tpu_custom_call.1} parent=1 // pred_check
      _
    $region39: #{tpu_custom_call.1} parent=1 // pred_check_branch
      %80 = sbr.rel (0) target = $region41
    $region40: #{tpu_custom_call.1} parent=1 // pred_region
      %81 = dma.done [#allocation9], 768
    $region41: #{tpu_custom_call.1} parent=1 // pred_fallthru
      _
    %v83 = vld [vmem:[#allocation2] sm:$0xf]
    %v84 = vld [vmem:[#allocation2 + $0x4] sm:$0xf]
    %v85 = vld [vmem:[#allocation2 + $0x8] sm:$0xf]
    %v86 = vld [vmem:[#allocation2 + $0xc] sm:$0xf]
    %v87 = vld [vmem:[#allocation2 + $0x10] sm:$0xf]
    %v88 = vld [vmem:[#allocation2 + $0x14] sm:$0xf]
    %v89 = vld [vmem:[#allocation5] sm:$0xf]
    %v90 = vld [vmem:[#allocation5 + $0x4] sm:$0xf]
    %v91 = vld [vmem:[#allocation5 + $0x8] sm:$0xf]
    %v92 = vld [vmem:[#allocation5 + $0xc] sm:$0xf]
    %v93 = vld [vmem:[#allocation5 + $0x10] sm:$0xf]
    %v94 = vld [vmem:[#allocation5 + $0x14] sm:$0xf]
    %v95 = vld [vmem:[#allocation7] sm:$0xf]
    %v96 = vld [vmem:[#allocation7 + $0x4] sm:$0xf]
    %v97 = vld [vmem:[#allocation7 + $0x8] sm:$0xf]
    %v98 = vld [vmem:[#allocation7 + $0xc] sm:$0xf]
    %v99 = vld [vmem:[#allocation7 + $0x10] sm:$0xf]
    %v100 = vld [vmem:[#allocation7 + $0x14] sm:$0xf]
    %v101 = vld [vmem:[#allocation7 + $0x18] sm:$0xf]
    %v102 = vld [vmem:[#allocation7 + $0x1c] sm:$0xf]
    %v103 = vld [vmem:[#allocation7 + $0x20] sm:$0xf]
    %v104 = vld [vmem:[#allocation7 + $0x24] sm:$0xf]
    %v105 = vld [vmem:[#allocation7 + $0x28] sm:$0xf]
    %v106 = vld [vmem:[#allocation7 + $0x2c] sm:$0xf]
    %v107 = vld [vmem:[#allocation8] sm:$0xf]
    %v108 = vld [vmem:[#allocation8 + $0x4] sm:$0xf]
    %v109 = vld [vmem:[#allocation8 + $0x8] sm:$0xf]
    %v110 = vld [vmem:[#allocation8 + $0xc] sm:$0xf]
    %v111 = vld [vmem:[#allocation8 + $0x10] sm:$0xf]
    %v112 = vld [vmem:[#allocation8 + $0x14] sm:$0xf]
    %v113 = vld [vmem:[#allocation8 + $0x18] sm:$0xf]
    %v114 = vld [vmem:[#allocation8 + $0x1c] sm:$0xf]
    %v115 = vld [vmem:[#allocation8 + $0x20] sm:$0xf]
    %v116 = vld [vmem:[#allocation8 + $0x24] sm:$0xf]
    %v117 = vld [vmem:[#allocation8 + $0x28] sm:$0xf]
    %v118 = vld [vmem:[#allocation8 + $0x2c] sm:$0xf]
    %v119 = vadd.bf16 %v95, %v107
    %v120 = vadd.bf16 %v96, %v108
    %v121 = vadd.bf16 %v97, %v109
    %v122 = vadd.bf16 %v98, %v110
    %v123 = vadd.bf16 %v99, %v111
    %v124 = vadd.bf16 %v100, %v112
    %v125 = vadd.bf16 %v101, %v113
    %v126 = vadd.bf16 %v102, %v114
    %v127 = vadd.bf16 %v103, %v115
    %v128 = vadd.bf16 %v104, %v116
    %v129 = vadd.bf16 %v105, %v117
    %v130 = vadd.bf16 %v106, %v118
    %v131 = vadd.bf16 %v83, %v89
    %v132 = vadd.bf16 %v84, %v90
    %v133 = vadd.bf16 %v85, %v91
    %v134 = vadd.bf16 %v86, %v92
    %v135 = vadd.bf16 %v87, %v93
    %v136 = vadd.bf16 %v88, %v94
    %v143 = vunpack.c.l.b16 %v83
    %v144 = vunpack.c.l.b16 %v84
    %v145 = vunpack.c.l.b16 %v85
    %v146 = vunpack.c.l.b16 %v86
    %v147 = vunpack.c.l.b16 %v87
    %v148 = vunpack.c.l.b16 %v88
    %v149 = vpack.c.b16 %v144, %v143
    %v150 = vpack.c.b16 %v146, %v145
    %v151 = vpack.c.b16 %v148, %v147
    %v164 = vunpack.c.l.b16 %v95
    %v165 = vunpack.c.l.b16 %v96
    %v166 = vunpack.c.l.b16 %v97
    %v167 = vunpack.c.l.b16 %v98
    %v168 = vunpack.c.l.b16 %v99
    %v169 = vunpack.c.l.b16 %v100
    %v170 = vunpack.c.l.b16 %v101
    %v171 = vunpack.c.l.b16 %v102
    %v172 = vunpack.c.l.b16 %v103
    %v173 = vunpack.c.l.b16 %v104
    %v174 = vunpack.c.l.b16 %v105
    %v175 = vunpack.c.l.b16 %v106
    %v176 = vpack.c.b16 %v165, %v164
    %v177 = vpack.c.b16 %v167, %v166
    %v178 = vpack.c.b16 %v169, %v168
    %v179 = vpack.c.b16 %v171, %v170
    %v180 = vpack.c.b16 %v173, %v172
    %v181 = vpack.c.b16 %v175, %v174
    %vm188 = vcmask 785408
    %v190 = vsel %vm188, %v149, 0
    %v193 = vsel %vm188, %v150, 0
    %v196 = vsel %vm188, %v151, 0
    %198 = vmatprep.subr.bf16.mxu0 0
    %199 = vmatpush1.bf16.msra.mxu0 %v176
    %200 = vmatprep.subr.bf16.mxu0 0
    %201 = vmatpush1.bf16.msra.mxu0 %v177
    %202 = vmatprep.subr.bf16.mxu0 0
    %203 = vmatpush1.bf16.msra.mxu0 %v178
    %204 = vmatprep.subr.bf16.mxu0 0
    %205 = vmatpush1.bf16.msra.mxu0 %v179
    %206 = vmatprep.subr.bf16.mxu0 0
    %207 = vmatpush1.bf16.msra.mxu0 %v180
    %208 = vmatprep.subr.bf16.mxu0 0
    %209 = vmatpush1.bf16.msra.mxu0 %v181
    %210 = vmatprep.subr.bf16.mxu0 0
    %211 = vmatpush1.bf16.msra.mxu0 0
    %212 = vmatprep.subr.bf16.mxu0 0
    %213 = vmatpush1.bf16.msra.mxu0 0
    %214 = vmatprep.subr.bf16.mxu0 0
    %215 = vmatpush1.bf16.msra.mxu0 0
    %216 = vmatprep.subr.bf16.mxu0 0
    %217 = vmatpush1.bf16.msra.mxu0 0
    %218 = vmatprep.subr.bf16.mxu0 0
    %219 = vmatpush1.bf16.msra.mxu0 0
    %220 = vmatprep.subr.bf16.mxu0 0
    %221 = vmatpush1.bf16.msra.mxu0 0
    %222 = vmatprep.subr.bf16.mxu0 0
    %223 = vmatpush1.bf16.msra.mxu0 0
    %224 = vmatprep.subr.bf16.mxu0 0
    %225 = vmatpush1.bf16.msra.mxu0 0
    %226 = vmatprep.subr.bf16.mxu0 0
    %227 = vmatpush1.bf16.msra.mxu0 0
    %228 = vmatprep.subr.bf16.mxu0 0
    %229 = vmatpush1.bf16.msra.mxu0 0
    %230 = vmatprep.mubr.bf16.mxu0 0
    %231 = vmatmul.mubr.bf16.gmra.mrb[0].mxu0 %v190
    %v232 = vpop.f32.mrb[0].mxu0
    %v233 = vadd.f32 0.0, %v232
    %v234 = vpop.f32.mrb[0].mxu0
    %v235 = vpop.f32.mrb[0].mxu0
    %v236 = vadd.f32 0.0, %v235
    %v237 = vpop.f32.mrb[0].mxu0
    %238 = vmatprep.mubr.bf16.mxu0 0
    %239 = vmatmul.mubr.bf16.gmra.mrb[0].mxu0 %v193
    %v240 = vpop.f32.mrb[0].mxu0
    %v241 = vadd.f32 0.0, %v240
    %v242 = vpop.f32.mrb[0].mxu0
    %v243 = vpop.f32.mrb[0].mxu0
    %v244 = vadd.f32 0.0, %v243
    %v245 = vpop.f32.mrb[0].mxu0
    %246 = vmatprep.mubr.bf16.mxu0 0
    %247 = vmatmul.mubr.bf16.gmra.mrb[0].mxu0 %v196
    %v248 = vpop.f32.mrb[0].mxu0
    %v249 = vadd.f32 0.0, %v248
    %v250 = vpop.f32.mrb[0].mxu0
    %v251 = vpop.f32.mrb[0].mxu0
    %v252 = vadd.f32 0.0, %v251
    %v253 = vpop.f32.mrb[0].mxu0
    %254 = vdwg.mxu0
    %v261 = vunpack.c.l.b16 %v89
    %v262 = vunpack.c.l.b16 %v90
    %v263 = vunpack.c.l.b16 %v91
    %v264 = vunpack.c.l.b16 %v92
    %v265 = vunpack.c.l.b16 %v93
    %v266 = vunpack.c.l.b16 %v94
    %v267 = vpack.c.b16 %v262, %v261
    %v268 = vpack.c.b16 %v264, %v263
    %v269 = vpack.c.b16 %v266, %v265
    %v282 = vunpack.c.l.b16 %v107
    %v283 = vunpack.c.l.b16 %v108
    %v284 = vunpack.c.l.b16 %v109
    %v285 = vunpack.c.l.b16 %v110
    %v286 = vunpack.c.l.b16 %v111
    %v287 = vunpack.c.l.b16 %v112
    %v288 = vunpack.c.l.b16 %v113
    %v289 = vunpack.c.l.b16 %v114
    %v290 = vunpack.c.l.b16 %v115
    %v291 = vunpack.c.l.b16 %v116
    %v292 = vunpack.c.l.b16 %v117
    %v293 = vunpack.c.l.b16 %v118
    %v294 = vpack.c.b16 %v283, %v282
    %v295 = vpack.c.b16 %v285, %v284
    %v296 = vpack.c.b16 %v287, %v286
    %v297 = vpack.c.b16 %v289, %v288
    %v298 = vpack.c.b16 %v291, %v290
    %v299 = vpack.c.b16 %v293, %v292
    %v307 = vsel %vm188, %v267, 0
    %v310 = vsel %vm188, %v268, 0
    %v313 = vsel %vm188, %v269, 0
    %315 = vmatprep.subr.bf16.mxu0 0
    %316 = vmatpush1.bf16.msra.mxu0 %v294
    %317 = vmatprep.subr.bf16.mxu0 0
    %318 = vmatpush1.bf16.msra.mxu0 %v295
    %319 = vmatprep.subr.bf16.mxu0 0
    %320 = vmatpush1.bf16.msra.mxu0 %v296
    %321 = vmatprep.subr.bf16.mxu0 0
    %322 = vmatpush1.bf16.msra.mxu0 %v297
    %323 = vmatprep.subr.bf16.mxu0 0
    %324 = vmatpush1.bf16.msra.mxu0 %v298
    %325 = vmatprep.subr.bf16.mxu0 0
    %326 = vmatpush1.bf16.msra.mxu0 %v299
    %327 = vmatprep.subr.bf16.mxu0 0
    %328 = vmatpush1.bf16.msra.mxu0 0
    %329 = vmatprep.subr.bf16.mxu0 0
    %330 = vmatpush1.bf16.msra.mxu0 0
    %331 = vmatprep.subr.bf16.mxu0 0
    %332 = vmatpush1.bf16.msra.mxu0 0
    %333 = vmatprep.subr.bf16.mxu0 0
    %334 = vmatpush1.bf16.msra.mxu0 0
    %335 = vmatprep.subr.bf16.mxu0 0
    %336 = vmatpush1.bf16.msra.mxu0 0
    %337 = vmatprep.subr.bf16.mxu0 0
    %338 = vmatpush1.bf16.msra.mxu0 0
    %339 = vmatprep.subr.bf16.mxu0 0
    %340 = vmatpush1.bf16.msra.mxu0 0
    %341 = vmatprep.subr.bf16.mxu0 0
    %342 = vmatpush1.bf16.msra.mxu0 0
    %343 = vmatprep.subr.bf16.mxu0 0
    %344 = vmatpush1.bf16.msra.mxu0 0
    %345 = vmatprep.subr.bf16.mxu0 0
    %346 = vmatpush1.bf16.msra.mxu0 0
    %347 = vmatprep.mubr.bf16.mxu0 0
    %348 = vmatmul.mubr.bf16.gmra.mrb[0].mxu0 %v307
    %v349 = vpop.f32.mrb[0].mxu0
    %v350 = vadd.f32 0.0, %v349
    %v351 = vpop.f32.mrb[0].mxu0
    %v352 = vpop.f32.mrb[0].mxu0
    %v353 = vadd.f32 0.0, %v352
    %v354 = vpop.f32.mrb[0].mxu0
    %355 = vmatprep.mubr.bf16.mxu0 0
    %356 = vmatmul.mubr.bf16.gmra.mrb[0].mxu0 %v310
    %v357 = vpop.f32.mrb[0].mxu0
    %v358 = vadd.f32 0.0, %v357
    %v359 = vpop.f32.mrb[0].mxu0
    %v360 = vpop.f32.mrb[0].mxu0
    %v361 = vadd.f32 0.0, %v360
    %v362 = vpop.f32.mrb[0].mxu0
    %363 = vmatprep.mubr.bf16.mxu0 0
    %364 = vmatmul.mubr.bf16.gmra.mrb[0].mxu0 %v313
    %v365 = vpop.f32.mrb[0].mxu0
    %v366 = vadd.f32 0.0, %v365
    %v367 = vpop.f32.mrb[0].mxu0
    %v368 = vpop.f32.mrb[0].mxu0
    %v369 = vadd.f32 0.0, %v368
    %v370 = vpop.f32.mrb[0].mxu0
    %371 = vdwg.mxu0
    %v378 = vunpack.c.l.b16 %v131
    %v379 = vunpack.c.l.b16 %v132
    %v380 = vunpack.c.l.b16 %v133
    %v381 = vunpack.c.l.b16 %v134
    %v382 = vunpack.c.l.b16 %v135
    %v383 = vunpack.c.l.b16 %v136
    %v384 = vpack.c.b16 %v379, %v378
    %v385 = vpack.c.b16 %v381, %v380
    %v386 = vpack.c.b16 %v383, %v382
    %v399 = vunpack.c.l.b16 %v119
    %v400 = vunpack.c.l.b16 %v120
    %v401 = vunpack.c.l.b16 %v121
    %v402 = vunpack.c.l.b16 %v122
    %v403 = vunpack.c.l.b16 %v123
    %v404 = vunpack.c.l.b16 %v124
    %v405 = vunpack.c.l.b16 %v125
    %v406 = vunpack.c.l.b16 %v126
    %v407 = vunpack.c.l.b16 %v127
    %v408 = vunpack.c.l.b16 %v128
    %v409 = vunpack.c.l.b16 %v129
    %v410 = vunpack.c.l.b16 %v130
    %v411 = vpack.c.b16 %v400, %v399
    %v412 = vpack.c.b16 %v402, %v401
    %v413 = vpack.c.b16 %v404, %v403
    %v414 = vpack.c.b16 %v406, %v405
    %v415 = vpack.c.b16 %v408, %v407
    %v416 = vpack.c.b16 %v410, %v409
    %v424 = vsel %vm188, %v384, 0
    %v427 = vsel %vm188, %v385, 0
    %v430 = vsel %vm188, %v386, 0
    %432 = vmatprep.subr.bf16.mxu0 0
    %433 = vmatpush1.bf16.msra.mxu0 %v411
    %434 = vmatprep.subr.bf16.mxu0 0
    %435 = vmatpush1.bf16.msra.mxu0 %v412
    %436 = vmatprep.subr.bf16.mxu0 0
    %437 = vmatpush1.bf16.msra.mxu0 %v413
    %438 = vmatprep.subr.bf16.mxu0 0
    %439 = vmatpush1.bf16.msra.mxu0 %v414
    %440 = vmatprep.subr.bf16.mxu0 0
    %441 = vmatpush1.bf16.msra.mxu0 %v415
    %442 = vmatprep.subr.bf16.mxu0 0
    %443 = vmatpush1.bf16.msra.mxu0 %v416
    %444 = vmatprep.subr.bf16.mxu0 0
    %445 = vmatpush1.bf16.msra.mxu0 0
    %446 = vmatprep.subr.bf16.mxu0 0
    %447 = vmatpush1.bf16.msra.mxu0 0
    %448 = vmatprep.subr.bf16.mxu0 0
    %449 = vmatpush1.bf16.msra.mxu0 0
    %450 = vmatprep.subr.bf16.mxu0 0
    %451 = vmatpush1.bf16.msra.mxu0 0
    %452 = vmatprep.subr.bf16.mxu0 0
    %453 = vmatpush1.bf16.msra.mxu0 0
    %454 = vmatprep.subr.bf16.mxu0 0
    %455 = vmatpush1.bf16.msra.mxu0 0
    %456 = vmatprep.subr.bf16.mxu0 0
    %457 = vmatpush1.bf16.msra.mxu0 0
    %458 = vmatprep.subr.bf16.mxu0 0
    %459 = vmatpush1.bf16.msra.mxu0 0
    %460 = vmatprep.subr.bf16.mxu0 0
    %461 = vmatpush1.bf16.msra.mxu0 0
    %462 = vmatprep.subr.bf16.mxu0 0
    %463 = vmatpush1.bf16.msra.mxu0 0
    %464 = vmatprep.mubr.bf16.mxu0 0
    %465 = vmatmul.mubr.bf16.gmra.mrb[0].mxu0 %v424
    %v466 = vpop.f32.mrb[0].mxu0
    %v467 = vadd.f32 0.0, %v466
    %v468 = vpop.f32.mrb[0].mxu0
    %v469 = vpop.f32.mrb[0].mxu0
    %v470 = vadd.f32 0.0, %v469
    %v471 = vpop.f32.mrb[0].mxu0
    %472 = vmatprep.mubr.bf16.mxu0 0
    %473 = vmatmul.mubr.bf16.gmra.mrb[0].mxu0 %v427
    %v474 = vpop.f32.mrb[0].mxu0
    %v475 = vadd.f32 0.0, %v474
    %v476 = vpop.f32.mrb[0].mxu0
    %v477 = vpop.f32.mrb[0].mxu0
    %v478 = vadd.f32 0.0, %v477
    %v479 = vpop.f32.mrb[0].mxu0
    %480 = vmatprep.mubr.bf16.mxu0 0
    %481 = vmatmul.mubr.bf16.gmra.mrb[0].mxu0 %v430
    %v482 = vpop.f32.mrb[0].mxu0
    %v483 = vadd.f32 0.0, %v482
    %v484 = vpop.f32.mrb[0].mxu0
    %v485 = vpop.f32.mrb[0].mxu0
    %v486 = vadd.f32 0.0, %v485
    %v487 = vpop.f32.mrb[0].mxu0
    %488 = vdwg.mxu0
    %v489 = vsub.f32 %v233, %v350
    %v490 = vsub.f32 %v236, %v353
    %v491 = vsub.f32 %v241, %v358
    %v492 = vsub.f32 %v244, %v361
    %v493 = vsub.f32 %v249, %v366
    %v494 = vsub.f32 %v252, %v369
    %v495 = vld [vmem:[%s4] sm:$0x1]
    %v497 = vlaneseq
    %v498 = vshrl.u32 %v497, 7
    %v499 = vsub.s32 0, %v498
    %v500 = vrot.slane %v495, %v499
    %v502 = vadd.f32 %v489, %v500
    %v503 = vadd.f32 %v490, %v500
    %v504 = vadd.f32 %v491, %v500
    %v505 = vadd.f32 %v492, %v500
    %v506 = vadd.f32 %v493, %v500
    %v507 = vadd.f32 %v494, %v500
    %v508 = vsub.f32 %v467, %v233
    %v509 = vsub.f32 %v470, %v236
    %v510 = vsub.f32 %v475, %v241
    %v511 = vsub.f32 %v478, %v244
    %v512 = vsub.f32 %v483, %v249
    %v513 = vsub.f32 %v486, %v252
    %v514 = vsub.f32 %v508, %v350
    %v515 = vsub.f32 %v509, %v353
    %v516 = vsub.f32 %v510, %v358
    %v517 = vsub.f32 %v511, %v361
    %v518 = vsub.f32 %v512, %v366
    %v519 = vsub.f32 %v513, %v369
    %v520 = vld [vmem:[%s5] sm:$0x1]
    %v522 = vlaneseq
    %v523 = vshrl.u32 %v522, 7
    %v524 = vsub.s32 0, %v523
    %v525 = vrot.slane %v520, %v524
    %v527 = vadd.f32 %v514, %v525
    %v528 = vadd.f32 %v515, %v525
    %v529 = vadd.f32 %v516, %v525
    %v530 = vadd.f32 %v517, %v525
    %v531 = vadd.f32 %v518, %v525
    %v532 = vadd.f32 %v519, %v525
    %v533 = vmax.f32 %v502, 0.0
    %v534 = vmax.f32 %v503, 0.0
    %v535 = vmax.f32 %v504, 0.0
    %v536 = vmax.f32 %v505, 0.0
    %v537 = vmax.f32 %v506, 0.0
    %v538 = vmax.f32 %v507, 0.0
    %v539 = vmax.f32 %v527, 0.0
    %v540 = vmax.f32 %v528, 0.0
    %v541 = vmax.f32 %v529, 0.0
    %v542 = vmax.f32 %v530, 0.0
    %v543 = vmax.f32 %v531, 0.0
    %v544 = vmax.f32 %v532, 0.0
    %545 = vst [vmem:[#allocation10] sm:$0xff] %v533
    %546 = vst [vmem:[#allocation10 + $0x8] sm:$0xff] %v534
    %547 = vst [vmem:[#allocation10 + $0x10] sm:$0xff] %v535
    %548 = vst [vmem:[#allocation10 + $0x18] sm:$0xff] %v536
    %549 = vst [vmem:[#allocation10 + $0x20] sm:$0xff] %v537
    %550 = vst [vmem:[#allocation10 + $0x28] sm:$0xff] %v538
    %551 = vst [vmem:[#allocation11] sm:$0xff] %v539
    %552 = vst [vmem:[#allocation11 + $0x8] sm:$0xff] %v540
    %553 = vst [vmem:[#allocation11 + $0x10] sm:$0xff] %v541
    %554 = vst [vmem:[#allocation11 + $0x18] sm:$0xff] %v542
    %555 = vst [vmem:[#allocation11 + $0x20] sm:$0xff] %v543
    %556 = vst [vmem:[#allocation11 + $0x28] sm:$0xff] %v544
    // Predicated region
    $region42: #{tpu_custom_call.1} parent=1 // pred_check
      _
    $region43: #{tpu_custom_call.1} parent=1 // pred_check_branch
      %558 = sbr.rel (0) target = $region45
    $region44: #{tpu_custom_call.1} parent=1 // pred_region
      %s560 = ssub.s32 768, 768
      %561 = vsyncadd [#allocation4], %s560
      %s562 = sshll.u32 [#allocation10], 4
      %s563 = int_to_ptr.vmem [resolvable:$true] %s562
      %568 = dma.vmem_to_hbm [thread:$0]  %s563, 768, %s6, [#allocation4], 128, 128, 8
    $region45: #{tpu_custom_call.1} parent=1 // pred_fallthru
      _
    // Predicated region
    $region46: #{tpu_custom_call.1} parent=1 // pred_check
      _
    $region47: #{tpu_custom_call.1} parent=1 // pred_check_branch
      %570 = sbr.rel (0) target = $region49
    $region48: #{tpu_custom_call.1} parent=1 // pred_region
      %s572 = ssub.s32 768, 768
      %573 = vsyncadd [#allocation12], %s572
      %s574 = sshll.u32 [#allocation11], 4
      %s575 = int_to_ptr.vmem [resolvable:$true] %s574
      %580 = dma.vmem_to_hbm [thread:$0]  %s575, 768, %s7, [#allocation12], 128, 128, 8
    $region49: #{tpu_custom_call.1} parent=1 // pred_fallthru
      _
    // Predicated region
    $region50: #{tpu_custom_call.1} parent=1 // pred_check
      _
    $region51: #{tpu_custom_call.1} parent=1 // pred_check_branch
      %582 = sbr.rel (0) target = $region53
    $region52: #{tpu_custom_call.1} parent=1 // pred_region
      %583 = dma.done [#allocation4], 768
    $region53: #{tpu_custom_call.1} parent=1 // pred_fallthru
      _
    // Predicated region
    $region54: #{tpu_custom_call.1} parent=1 // pred_check
      _
    $region55: #{tpu_custom_call.1} parent=1 // pred_check_branch
      %585 = sbr.rel (0) target = $region57
    $region56: #{tpu_custom_call.1} parent=1 // pred_region
      %586 = dma.done [#allocation12], 768
    $region57: #{tpu_custom_call.1} parent=1 // pred_fallthru
      _
    %587 = vsyncpa [#allocation3], 1
    %588 = vsyncpa [#allocation6], 1
    %589 = vsyncpa [#allocation9], 1
    %590 = vsyncpa [#allocation4], 1
    %591 = vsyncpa [#allocation12], 1

</llo_original>
